<compile_context>
chip_gen: v6e
topology: v6e:2x2x1
jax: 0.10.0
libtpu: 0.0.40
codegen_flags: <defaults>
</compile_context>

<pallas_src>
import math
import jax
import jax.numpy as jnp
from jax import lax
from jax.experimental import pallas as pl
from jax.experimental.pallas import tpu as pltpu

NDMA = 8               # outstanding row DMAs per grid step
MAX_TOK_BLOCK = 512    # max tokens gathered per grid step (multiple of 8)


def _round_up(x, m):
    return ((x + m - 1) // m) * m


def embed_gather_kernel(ids_ref, w_hbm, out_ref, buf, sem):
    """ids_ref: SMEM (n_pad,) int32   -- scalar-prefetched token ids
       w_hbm:   HBM  (vocab, dim)     -- embedding table, left in HBM
       out_ref: VMEM (tok_block, dim) -- output tile for this grid step
       buf:     VMEM (tok_block, dim) -- gather staging buffer
       sem:     DMA semaphores, shape (NDMA,)"""
    tok_block = buf.shape[0]
    base = pl.program_id(0) * tok_block

    def issue(t):
        # Row-gather DMA: HBM row ids[base + t] -> staging row t.
        tok = ids_ref[base + t]
        pltpu.make_async_copy(w_hbm.at[tok], buf.at[t], sem.at[t % NDMA]).start()

    def wait_slot(slot):
        # Only the semaphore + transfer size matter for the wait.
        pltpu.make_async_copy(w_hbm.at[0], buf.at[0], sem.at[slot]).wait()

    n_prime = min(NDMA, tok_block)

    # Prime: put n_prime row copies in flight.
    for s in range(n_prime):
        issue(s)

    # Steady state: wait for copy t (slot t % NDMA), then reuse that slot
    # for copy t + NDMA.  Keeps NDMA row DMAs in flight at all times.
    def body(t, carry):
        wait_slot(t % NDMA)
        issue(t + NDMA)
        return carry

    lax.fori_loop(0, tok_block - n_prime, body, 0)

    # Drain the last n_prime in-flight copies.
    for i in range(n_prime):
        wait_slot((tok_block - n_prime + i) % NDMA)

    # One dense, unmasked tile store (no per-row partial stores).
    out_ref[...] = buf[...]


def embeddings_forward(input_ids, weight, *, max_tok_block=MAX_TOK_BLOCK):
    """input_ids: (bs, seq) int32
       weight:    (vocab, dim)
       returns:   (bs, seq, dim) same dtype as weight"""
    bs, seq = input_ids.shape
    vocab, dim = weight.shape
    n = bs * seq

    ids_flat = input_ids.reshape(n).astype(jnp.int32)
    # Clamp ids: VMEM/HBM refs have no runtime OOB check, so make out-of-range
    # ids impossible rather than silently reading garbage.
    ids_flat = jnp.clip(ids_flat, 0, vocab - 1)

    # Pick the largest tile up to max_tok_block (kept a multiple of 8 for f32
    # sublane alignment) and pad the token axis to a whole number of tiles.
    tok_block = min(max_tok_block, _round_up(n, 8))
    n_pad = _round_up(n, tok_block)
    if n_pad != n:
        ids_flat = jnp.pad(ids_flat, (0, n_pad - n))  # pad id 0 is in-range

    # NOTE: ids live in SMEM (i32[n_pad] pads to next_pow2(4*n_pad) bytes);
    # for very large bs*seq (~1M+ tokens) chunk the token axis outside.
    out_flat = pl.pallas_call(
        embed_gather_kernel,
        out_shape=jax.ShapeDtypeStruct((n_pad, dim), weight.dtype),
        grid_spec=pltpu.PrefetchScalarGridSpec(
            num_scalar_prefetch=1,                # ids -> SMEM before the grid
            grid=(n_pad // tok_block,),
            in_specs=[
                # Embedding table stays in HBM; rows are DMA-gathered manually.
                pl.BlockSpec(memory_space=pl.ANY),
            ],
            out_specs=pl.BlockSpec((tok_block, dim), lambda i, ids: (i, 0)),
            scratch_shapes=[
                pltpu.VMEM((tok_block, dim), weight.dtype),  # gather staging
                pltpu.SemaphoreType.DMA((NDMA,)),            # rolling DMA sems
            ],
        ),
        compiler_params=pltpu.CompilerParams(
            dimension_semantics=("parallel",),     # v7x: shard across both TCs
            vmem_limit_bytes=32 * 1024 * 1024,     # ample headroom, safe on v5e..v7x
        ),
    )(ids_flat, weight)

    # dropout (eval mode) == identity
    return out_flat[:n].reshape(bs, seq, dim)


def init_embedding_weight(key, vocab_size, embed_dim, dtype=jnp.float32):
    # matches: nn.init.uniform_(w, a=-sqrt(3/dim), b=sqrt(3/dim))
    bound = math.sqrt(3.0 / embed_dim)
    return jax.random.uniform(
        key, (vocab_size, embed_dim), dtype=dtype, minval=-bound, maxval=bound
    )


if __name__ == "__main__":
    # small config consistent with the module
    vocab_size = 64
    embed_dim = 128
    pad_token_id = 0
    bs, seq = 2, 8

    key = jax.random.PRNGKey(0)
    k_w, k_ids = jax.random.split(key)

    weight = init_embedding_weight(k_w, vocab_size, embed_dim)
    input_ids = jax.random.randint(k_ids, (bs, seq), 0, vocab_size, dtype=jnp.int32)

    out = embeddings_forward(input_ids, weight)
    out = jax.block_until_ready(out)

    # sanity check against plain-JAX reference gather
    ref = jnp.take(weight, input_ids.reshape(-1), axis=0).reshape(bs, seq, embed_dim)
    assert out.shape == (bs, seq, embed_dim)
    assert jnp.allclose(out, ref), "mismatch vs reference embedding lookup"

    print("KERNEL_OK")
</pallas_src>

<mosaic_0001>
module attributes {stable_mosaic.version = 11 : i64} {
  func.func @embed_gather_kernel(%arg0: i32, %arg1: memref<16xi32, #tpu.memory_space<smem>>, %arg2: memref<64x128xf32, #tpu.memory_space<any>>, %arg3: memref<16x128xf32, #tpu.memory_space<vmem>>, %arg4: memref<16x128xf32, #tpu.memory_space<vmem>>, %arg5: memref<8x!tpu.dma_semaphore, #tpu.memory_space<semaphore_mem>>) attributes {dimension_semantics = [#tpu.dimension_semantics<parallel>], iteration_bounds = array<i64: 1>, scalar_prefetch = 1 : i64, scratch_operands = 2 : i64, tpu.core_type = #tpu.core_type<tc>, window_params = [{}, {transform_indices = @transform_1, window_bounds = array<i64: 16, 128>}]} {
    %c16_i32 = arith.constant 16 : i32
    %0 = arith.muli %arg0, %c16_i32 : i32
    %c0_i32 = arith.constant 0 : i32
    %1 = arith.addi %0, %c0_i32 : i32
    %2 = arith.index_cast %1 : i32 to index
    %3 = memref.load %arg1[%2] : memref<16xi32, #tpu.memory_space<smem>>
    %c0_i32_0 = arith.constant 0 : i32
    %c0_i32_1 = arith.constant 0 : i32
    %c0_i32_2 = arith.constant 0 : i32
    %4 = tpu.memref_slice %arg2[%3, %c0_i32_2] : memref<64x128xf32, #tpu.memory_space<any>> -> memref<1x128xf32, #tpu.memory_space<any>>
    %5 = tpu.memref_squeeze %4 : memref<1x128xf32, #tpu.memory_space<any>> -> memref<128xf32, #tpu.memory_space<any>>
    %c0_i32_3 = arith.constant 0 : i32
    %6 = tpu.memref_slice %arg4[%c0_i32_0, %c0_i32_3] : memref<16x128xf32, #tpu.memory_space<vmem>> -> memref<1x128xf32, #tpu.memory_space<vmem>>
    %7 = tpu.memref_squeeze %6 : memref<1x128xf32, #tpu.memory_space<vmem>> -> memref<128xf32, #tpu.memory_space<vmem>>
    %8 = tpu.memref_slice %arg5[%c0_i32_1] : memref<8x!tpu.dma_semaphore, #tpu.memory_space<semaphore_mem>> -> memref<1x!tpu.dma_semaphore, #tpu.memory_space<semaphore_mem>>
    %9 = tpu.memref_squeeze %8 : memref<1x!tpu.dma_semaphore, #tpu.memory_space<semaphore_mem>> -> memref<!tpu.dma_semaphore, #tpu.memory_space<semaphore_mem>>
    tpu.enqueue_dma source(%5 : memref<128xf32, #tpu.memory_space<any>>) target(%7 : memref<128xf32, #tpu.memory_space<vmem>>) target_semaphore(%9 : memref<!tpu.dma_semaphore, #tpu.memory_space<semaphore_mem>>)
    %c1_i32 = arith.constant 1 : i32
    %10 = arith.addi %0, %c1_i32 : i32
    %11 = arith.index_cast %10 : i32 to index
    %12 = memref.load %arg1[%11] : memref<16xi32, #tpu.memory_space<smem>>
    %c1_i32_4 = arith.constant 1 : i32
    %c1_i32_5 = arith.constant 1 : i32
    %c0_i32_6 = arith.constant 0 : i32
    %13 = tpu.memref_slice %arg2[%12, %c0_i32_6] : memref<64x128xf32, #tpu.memory_space<any>> -> memref<1x128xf32, #tpu.memory_space<any>>
    %14 = tpu.memref_squeeze %13 : memref<1x128xf32, #tpu.memory_space<any>> -> memref<128xf32, #tpu.memory_space<any>>
    %c0_i32_7 = arith.constant 0 : i32
    %15 = tpu.memref_slice %arg4[%c1_i32_4, %c0_i32_7] : memref<16x128xf32, #tpu.memory_space<vmem>> -> memref<1x128xf32, #tpu.memory_space<vmem>>
    %16 = tpu.memref_squeeze %15 : memref<1x128xf32, #tpu.memory_space<vmem>> -> memref<128xf32, #tpu.memory_space<vmem>>
    %17 = tpu.memref_slice %arg5[%c1_i32_5] : memref<8x!tpu.dma_semaphore, #tpu.memory_space<semaphore_mem>> -> memref<1x!tpu.dma_semaphore, #tpu.memory_space<semaphore_mem>>
    %18 = tpu.memref_squeeze %17 : memref<1x!tpu.dma_semaphore, #tpu.memory_space<semaphore_mem>> -> memref<!tpu.dma_semaphore, #tpu.memory_space<semaphore_mem>>
    tpu.enqueue_dma source(%14 : memref<128xf32, #tpu.memory_space<any>>) target(%16 : memref<128xf32, #tpu.memory_space<vmem>>) target_semaphore(%18 : memref<!tpu.dma_semaphore, #tpu.memory_space<semaphore_mem>>)
    %c2_i32 = arith.constant 2 : i32
    %19 = arith.addi %0, %c2_i32 : i32
    %20 = arith.index_cast %19 : i32 to index
    %21 = memref.load %arg1[%20] : memref<16xi32, #tpu.memory_space<smem>>
    %c2_i32_8 = arith.constant 2 : i32
    %c2_i32_9 = arith.constant 2 : i32
    %c0_i32_10 = arith.constant 0 : i32
    %22 = tpu.memref_slice %arg2[%21, %c0_i32_10] : memref<64x128xf32, #tpu.memory_space<any>> -> memref<1x128xf32, #tpu.memory_space<any>>
    %23 = tpu.memref_squeeze %22 : memref<1x128xf32, #tpu.memory_space<any>> -> memref<128xf32, #tpu.memory_space<any>>
    %c0_i32_11 = arith.constant 0 : i32
    %24 = tpu.memref_slice %arg4[%c2_i32_8, %c0_i32_11] : memref<16x128xf32, #tpu.memory_space<vmem>> -> memref<1x128xf32, #tpu.memory_space<vmem>>
    %25 = tpu.memref_squeeze %24 : memref<1x128xf32, #tpu.memory_space<vmem>> -> memref<128xf32, #tpu.memory_space<vmem>>
    %26 = tpu.memref_slice %arg5[%c2_i32_9] : memref<8x!tpu.dma_semaphore, #tpu.memory_space<semaphore_mem>> -> memref<1x!tpu.dma_semaphore, #tpu.memory_space<semaphore_mem>>
    %27 = tpu.memref_squeeze %26 : memref<1x!tpu.dma_semaphore, #tpu.memory_space<semaphore_mem>> -> memref<!tpu.dma_semaphore, #tpu.memory_space<semaphore_mem>>
    tpu.enqueue_dma source(%23 : memref<128xf32, #tpu.memory_space<any>>) target(%25 : memref<128xf32, #tpu.memory_space<vmem>>) target_semaphore(%27 : memref<!tpu.dma_semaphore, #tpu.memory_space<semaphore_mem>>)
    %c3_i32 = arith.constant 3 : i32
    %28 = arith.addi %0, %c3_i32 : i32
    %29 = arith.index_cast %28 : i32 to index
    %30 = memref.load %arg1[%29] : memref<16xi32, #tpu.memory_space<smem>>
    %c3_i32_12 = arith.constant 3 : i32
    %c3_i32_13 = arith.constant 3 : i32
    %c0_i32_14 = arith.constant 0 : i32
    %31 = tpu.memref_slice %arg2[%30, %c0_i32_14] : memref<64x128xf32, #tpu.memory_space<any>> -> memref<1x128xf32, #tpu.memory_space<any>>
    %32 = tpu.memref_squeeze %31 : memref<1x128xf32, #tpu.memory_space<any>> -> memref<128xf32, #tpu.memory_space<any>>
    %c0_i32_15 = arith.constant 0 : i32
    %33 = tpu.memref_slice %arg4[%c3_i32_12, %c0_i32_15] : memref<16x128xf32, #tpu.memory_space<vmem>> -> memref<1x128xf32, #tpu.memory_space<vmem>>
    %34 = tpu.memref_squeeze %33 : memref<1x128xf32, #tpu.memory_space<vmem>> -> memref<128xf32, #tpu.memory_space<vmem>>
    %35 = tpu.memref_slice %arg5[%c3_i32_13] : memref<8x!tpu.dma_semaphore, #tpu.memory_space<semaphore_mem>> -> memref<1x!tpu.dma_semaphore, #tpu.memory_space<semaphore_mem>>
    %36 = tpu.memref_squeeze %35 : memref<1x!tpu.dma_semaphore, #tpu.memory_space<semaphore_mem>> -> memref<!tpu.dma_semaphore, #tpu.memory_space<semaphore_mem>>
    tpu.enqueue_dma source(%32 : memref<128xf32, #tpu.memory_space<any>>) target(%34 : memref<128xf32, #tpu.memory_space<vmem>>) target_semaphore(%36 : memref<!tpu.dma_semaphore, #tpu.memory_space<semaphore_mem>>)
    %c4_i32 = arith.constant 4 : i32
    %37 = arith.addi %0, %c4_i32 : i32
    %38 = arith.index_cast %37 : i32 to index
    %39 = memref.load %arg1[%38] : memref<16xi32, #tpu.memory_space<smem>>
    %c4_i32_16 = arith.constant 4 : i32
    %c4_i32_17 = arith.constant 4 : i32
    %c0_i32_18 = arith.constant 0 : i32
    %40 = tpu.memref_slice %arg2[%39, %c0_i32_18] : memref<64x128xf32, #tpu.memory_space<any>> -> memref<1x128xf32, #tpu.memory_space<any>>
    %41 = tpu.memref_squeeze %40 : memref<1x128xf32, #tpu.memory_space<any>> -> memref<128xf32, #tpu.memory_space<any>>
    %c0_i32_19 = arith.constant 0 : i32
    %42 = tpu.memref_slice %arg4[%c4_i32_16, %c0_i32_19] : memref<16x128xf32, #tpu.memory_space<vmem>> -> memref<1x128xf32, #tpu.memory_space<vmem>>
    %43 = tpu.memref_squeeze %42 : memref<1x128xf32, #tpu.memory_space<vmem>> -> memref<128xf32, #tpu.memory_space<vmem>>
    %44 = tpu.memref_slice %arg5[%c4_i32_17] : memref<8x!tpu.dma_semaphore, #tpu.memory_space<semaphore_mem>> -> memref<1x!tpu.dma_semaphore, #tpu.memory_space<semaphore_mem>>
    %45 = tpu.memref_squeeze %44 : memref<1x!tpu.dma_semaphore, #tpu.memory_space<semaphore_mem>> -> memref<!tpu.dma_semaphore, #tpu.memory_space<semaphore_mem>>
    tpu.enqueue_dma source(%41 : memref<128xf32, #tpu.memory_space<any>>) target(%43 : memref<128xf32, #tpu.memory_space<vmem>>) target_semaphore(%45 : memref<!tpu.dma_semaphore, #tpu.memory_space<semaphore_mem>>)
    %c5_i32 = arith.constant 5 : i32
    %46 = arith.addi %0, %c5_i32 : i32
    %47 = arith.index_cast %46 : i32 to index
    %48 = memref.load %arg1[%47] : memref<16xi32, #tpu.memory_space<smem>>
    %c5_i32_20 = arith.constant 5 : i32
    %c5_i32_21 = arith.constant 5 : i32
    %c0_i32_22 = arith.constant 0 : i32
    %49 = tpu.memref_slice %arg2[%48, %c0_i32_22] : memref<64x128xf32, #tpu.memory_space<any>> -> memref<1x128xf32, #tpu.memory_space<any>>
    %50 = tpu.memref_squeeze %49 : memref<1x128xf32, #tpu.memory_space<any>> -> memref<128xf32, #tpu.memory_space<any>>
    %c0_i32_23 = arith.constant 0 : i32
    %51 = tpu.memref_slice %arg4[%c5_i32_20, %c0_i32_23] : memref<16x128xf32, #tpu.memory_space<vmem>> -> memref<1x128xf32, #tpu.memory_space<vmem>>
    %52 = tpu.memref_squeeze %51 : memref<1x128xf32, #tpu.memory_space<vmem>> -> memref<128xf32, #tpu.memory_space<vmem>>
    %53 = tpu.memref_slice %arg5[%c5_i32_21] : memref<8x!tpu.dma_semaphore, #tpu.memory_space<semaphore_mem>> -> memref<1x!tpu.dma_semaphore, #tpu.memory_space<semaphore_mem>>
    %54 = tpu.memref_squeeze %53 : memref<1x!tpu.dma_semaphore, #tpu.memory_space<semaphore_mem>> -> memref<!tpu.dma_semaphore, #tpu.memory_space<semaphore_mem>>
    tpu.enqueue_dma source(%50 : memref<128xf32, #tpu.memory_space<any>>) target(%52 : memref<128xf32, #tpu.memory_space<vmem>>) target_semaphore(%54 : memref<!tpu.dma_semaphore, #tpu.memory_space<semaphore_mem>>)
    %c6_i32 = arith.constant 6 : i32
    %55 = arith.addi %0, %c6_i32 : i32
    %56 = arith.index_cast %55 : i32 to index
    %57 = memref.load %arg1[%56] : memref<16xi32, #tpu.memory_space<smem>>
    %c6_i32_24 = arith.constant 6 : i32
    %c6_i32_25 = arith.constant 6 : i32
    %c0_i32_26 = arith.constant 0 : i32
    %58 = tpu.memref_slice %arg2[%57, %c0_i32_26] : memref<64x128xf32, #tpu.memory_space<any>> -> memref<1x128xf32, #tpu.memory_space<any>>
    %59 = tpu.memref_squeeze %58 : memref<1x128xf32, #tpu.memory_space<any>> -> memref<128xf32, #tpu.memory_space<any>>
    %c0_i32_27 = arith.constant 0 : i32
    %60 = tpu.memref_slice %arg4[%c6_i32_24, %c0_i32_27] : memref<16x128xf32, #tpu.memory_space<vmem>> -> memref<1x128xf32, #tpu.memory_space<vmem>>
    %61 = tpu.memref_squeeze %60 : memref<1x128xf32, #tpu.memory_space<vmem>> -> memref<128xf32, #tpu.memory_space<vmem>>
    %62 = tpu.memref_slice %arg5[%c6_i32_25] : memref<8x!tpu.dma_semaphore, #tpu.memory_space<semaphore_mem>> -> memref<1x!tpu.dma_semaphore, #tpu.memory_space<semaphore_mem>>
    %63 = tpu.memref_squeeze %62 : memref<1x!tpu.dma_semaphore, #tpu.memory_space<semaphore_mem>> -> memref<!tpu.dma_semaphore, #tpu.memory_space<semaphore_mem>>
    tpu.enqueue_dma source(%59 : memref<128xf32, #tpu.memory_space<any>>) target(%61 : memref<128xf32, #tpu.memory_space<vmem>>) target_semaphore(%63 : memref<!tpu.dma_semaphore, #tpu.memory_space<semaphore_mem>>)
    %c7_i32 = arith.constant 7 : i32
    %64 = arith.addi %0, %c7_i32 : i32
    %65 = arith.index_cast %64 : i32 to index
    %66 = memref.load %arg1[%65] : memref<16xi32, #tpu.memory_space<smem>>
    %c7_i32_28 = arith.constant 7 : i32
    %c7_i32_29 = arith.constant 7 : i32
    %c0_i32_30 = arith.constant 0 : i32
    %67 = tpu.memref_slice %arg2[%66, %c0_i32_30] : memref<64x128xf32, #tpu.memory_space<any>> -> memref<1x128xf32, #tpu.memory_space<any>>
    %68 = tpu.memref_squeeze %67 : memref<1x128xf32, #tpu.memory_space<any>> -> memref<128xf32, #tpu.memory_space<any>>
    %c0_i32_31 = arith.constant 0 : i32
    %69 = tpu.memref_slice %arg4[%c7_i32_28, %c0_i32_31] : memref<16x128xf32, #tpu.memory_space<vmem>> -> memref<1x128xf32, #tpu.memory_space<vmem>>
    %70 = tpu.memref_squeeze %69 : memref<1x128xf32, #tpu.memory_space<vmem>> -> memref<128xf32, #tpu.memory_space<vmem>>
    %71 = tpu.memref_slice %arg5[%c7_i32_29] : memref<8x!tpu.dma_semaphore, #tpu.memory_space<semaphore_mem>> -> memref<1x!tpu.dma_semaphore, #tpu.memory_space<semaphore_mem>>
    %72 = tpu.memref_squeeze %71 : memref<1x!tpu.dma_semaphore, #tpu.memory_space<semaphore_mem>> -> memref<!tpu.dma_semaphore, #tpu.memory_space<semaphore_mem>>
    tpu.enqueue_dma source(%68 : memref<128xf32, #tpu.memory_space<any>>) target(%70 : memref<128xf32, #tpu.memory_space<vmem>>) target_semaphore(%72 : memref<!tpu.dma_semaphore, #tpu.memory_space<semaphore_mem>>)
    %c0_i32_32 = arith.constant 0 : i32
    %c8_i32 = arith.constant 8 : i32
    %73 = arith.addi %c0_i32_32, %c8_i32 : i32
    %c1_i32_33 = arith.constant 1 : i32
    scf.for %arg6 = %c0_i32_32 to %73 step %c1_i32_33  : i32 {
      %c8_i32_78 = arith.constant 8 : i32
      %c0_i32_79 = arith.constant 0 : i32
      %124 = arith.cmpi eq, %c8_i32_78, %c0_i32_79 : i32
      %c1_i32_80 = arith.constant 1 : i32
      %125 = arith.select %124, %c1_i32_80, %c8_i32_78 : i32
      %126 = arith.remsi %arg6, %125 : i32
      %c0_i32_81 = arith.constant 0 : i32
      %127 = arith.cmpi ne, %126, %c0_i32_81 : i32
      %c0_i32_82 = arith.constant 0 : i32
      %128 = arith.cmpi slt, %126, %c0_i32_82 : i32
      %c0_i32_83 = arith.constant 0 : i32
      %129 = arith.cmpi slt, %125, %c0_i32_83 : i32
      %130 = arith.xori %128, %129 : i1
      %131 = arith.andi %130, %127 : i1
      %132 = arith.addi %126, %125 : i32
      %133 = arith.select %131, %132, %126 : i32
      %c0_i32_84 = arith.constant 0 : i32
      %c0_i32_85 = arith.constant 0 : i32
      %c0_i32_86 = arith.constant 0 : i32
      %134 = tpu.memref_slice %arg2[%c0_i32_84, %c0_i32_86] : memref<64x128xf32, #tpu.memory_space<any>> -> memref<1x128xf32, #tpu.memory_space<any>>
      %135 = tpu.memref_squeeze %134 : memref<1x128xf32, #tpu.memory_space<any>> -> memref<128xf32, #tpu.memory_space<any>>
      %c0_i32_87 = arith.constant 0 : i32
      %136 = tpu.memref_slice %arg4[%c0_i32_85, %c0_i32_87] : memref<16x128xf32, #tpu.memory_space<vmem>> -> memref<1x128xf32, #tpu.memory_space<vmem>>
      %137 = tpu.memref_squeeze %136 : memref<1x128xf32, #tpu.memory_space<vmem>> -> memref<128xf32, #tpu.memory_space<vmem>>
      %138 = tpu.memref_slice %arg5[%133] : memref<8x!tpu.dma_semaphore, #tpu.memory_space<semaphore_mem>> -> memref<1x!tpu.dma_semaphore, #tpu.memory_space<semaphore_mem>>
      %139 = tpu.memref_squeeze %138 : memref<1x!tpu.dma_semaphore, #tpu.memory_space<semaphore_mem>> -> memref<!tpu.dma_semaphore, #tpu.memory_space<semaphore_mem>>
      tpu.wait_dma2 semaphore(%139 : memref<!tpu.dma_semaphore, #tpu.memory_space<semaphore_mem>>) src(%135 : memref<128xf32, #tpu.memory_space<any>>) dst(%137 : memref<128xf32, #tpu.memory_space<vmem>>)
      %c8_i32_88 = arith.constant 8 : i32
      %140 = arith.addi %arg6, %c8_i32_88 : i32
      %141 = arith.addi %0, %140 : i32
      %142 = arith.index_cast %141 : i32 to index
      %143 = memref.load %arg1[%142] : memref<16xi32, #tpu.memory_space<smem>>
      %c8_i32_89 = arith.constant 8 : i32
      %c0_i32_90 = arith.constant 0 : i32
      %144 = arith.cmpi eq, %c8_i32_89, %c0_i32_90 : i32
      %c1_i32_91 = arith.constant 1 : i32
      %145 = arith.select %144, %c1_i32_91, %c8_i32_89 : i32
      %146 = arith.remsi %140, %145 : i32
      %c0_i32_92 = arith.constant 0 : i32
      %147 = arith.cmpi ne, %146, %c0_i32_92 : i32
      %c0_i32_93 = arith.constant 0 : i32
      %148 = arith.cmpi slt, %146, %c0_i32_93 : i32
      %c0_i32_94 = arith.constant 0 : i32
      %149 = arith.cmpi slt, %145, %c0_i32_94 : i32
      %150 = arith.xori %148, %149 : i1
      %151 = arith.andi %150, %147 : i1
      %152 = arith.addi %146, %145 : i32
      %153 = arith.select %151, %152, %146 : i32
      %c0_i32_95 = arith.constant 0 : i32
      %154 = tpu.memref_slice %arg2[%143, %c0_i32_95] : memref<64x128xf32, #tpu.memory_space<any>> -> memref<1x128xf32, #tpu.memory_space<any>>
      %155 = tpu.memref_squeeze %154 : memref<1x128xf32, #tpu.memory_space<any>> -> memref<128xf32, #tpu.memory_space<any>>
      %c0_i32_96 = arith.constant 0 : i32
      %156 = tpu.memref_slice %arg4[%140, %c0_i32_96] : memref<16x128xf32, #tpu.memory_space<vmem>> -> memref<1x128xf32, #tpu.memory_space<vmem>>
      %157 = tpu.memref_squeeze %156 : memref<1x128xf32, #tpu.memory_space<vmem>> -> memref<128xf32, #tpu.memory_space<vmem>>
      %158 = tpu.memref_slice %arg5[%153] : memref<8x!tpu.dma_semaphore, #tpu.memory_space<semaphore_mem>> -> memref<1x!tpu.dma_semaphore, #tpu.memory_space<semaphore_mem>>
      %159 = tpu.memref_squeeze %158 : memref<1x!tpu.dma_semaphore, #tpu.memory_space<semaphore_mem>> -> memref<!tpu.dma_semaphore, #tpu.memory_space<semaphore_mem>>
      tpu.enqueue_dma source(%155 : memref<128xf32, #tpu.memory_space<any>>) target(%157 : memref<128xf32, #tpu.memory_space<vmem>>) target_semaphore(%159 : memref<!tpu.dma_semaphore, #tpu.memory_space<semaphore_mem>>)
    }
    %c8_i32_34 = arith.constant 8 : i32
    %c0_i32_35 = arith.constant 0 : i32
    %c0_i32_36 = arith.constant 0 : i32
    %c0_i32_37 = arith.constant 0 : i32
    %c0_i32_38 = arith.constant 0 : i32
    %74 = tpu.memref_slice %arg2[%c0_i32_35, %c0_i32_38] : memref<64x128xf32, #tpu.memory_space<any>> -> memref<1x128xf32, #tpu.memory_space<any>>
    %75 = tpu.memref_squeeze %74 : memref<1x128xf32, #tpu.memory_space<any>> -> memref<128xf32, #tpu.memory_space<any>>
    %c0_i32_39 = arith.constant 0 : i32
    %76 = tpu.memref_slice %arg4[%c0_i32_36, %c0_i32_39] : memref<16x128xf32, #tpu.memory_space<vmem>> -> memref<1x128xf32, #tpu.memory_space<vmem>>
    %77 = tpu.memref_squeeze %76 : memref<1x128xf32, #tpu.memory_space<vmem>> -> memref<128xf32, #tpu.memory_space<vmem>>
    %78 = tpu.memref_slice %arg5[%c0_i32_37] : memref<8x!tpu.dma_semaphore, #tpu.memory_space<semaphore_mem>> -> memref<1x!tpu.dma_semaphore, #tpu.memory_space<semaphore_mem>>
    %79 = tpu.memref_squeeze %78 : memref<1x!tpu.dma_semaphore, #tpu.memory_space<semaphore_mem>> -> memref<!tpu.dma_semaphore, #tpu.memory_space<semaphore_mem>>
    tpu.wait_dma2 semaphore(%79 : memref<!tpu.dma_semaphore, #tpu.memory_space<semaphore_mem>>) src(%75 : memref<128xf32, #tpu.memory_space<any>>) dst(%77 : memref<128xf32, #tpu.memory_space<vmem>>)
    %c0_i32_40 = arith.constant 0 : i32
    %c0_i32_41 = arith.constant 0 : i32
    %c1_i32_42 = arith.constant 1 : i32
    %c0_i32_43 = arith.constant 0 : i32
    %80 = tpu.memref_slice %arg2[%c0_i32_40, %c0_i32_43] : memref<64x128xf32, #tpu.memory_space<any>> -> memref<1x128xf32, #tpu.memory_space<any>>
    %81 = tpu.memref_squeeze %80 : memref<1x128xf32, #tpu.memory_space<any>> -> memref<128xf32, #tpu.memory_space<any>>
    %c0_i32_44 = arith.constant 0 : i32
    %82 = tpu.memref_slice %arg4[%c0_i32_41, %c0_i32_44] : memref<16x128xf32, #tpu.memory_space<vmem>> -> memref<1x128xf32, #tpu.memory_space<vmem>>
    %83 = tpu.memref_squeeze %82 : memref<1x128xf32, #tpu.memory_space<vmem>> -> memref<128xf32, #tpu.memory_space<vmem>>
    %84 = tpu.memref_slice %arg5[%c1_i32_42] : memref<8x!tpu.dma_semaphore, #tpu.memory_space<semaphore_mem>> -> memref<1x!tpu.dma_semaphore, #tpu.memory_space<semaphore_mem>>
    %85 = tpu.memref_squeeze %84 : memref<1x!tpu.dma_semaphore, #tpu.memory_space<semaphore_mem>> -> memref<!tpu.dma_semaphore, #tpu.memory_space<semaphore_mem>>
    tpu.wait_dma2 semaphore(%85 : memref<!tpu.dma_semaphore, #tpu.memory_space<semaphore_mem>>) src(%81 : memref<128xf32, #tpu.memory_space<any>>) dst(%83 : memref<128xf32, #tpu.memory_space<vmem>>)
    %c0_i32_45 = arith.constant 0 : i32
    %c0_i32_46 = arith.constant 0 : i32
    %c2_i32_47 = arith.constant 2 : i32
    %c0_i32_48 = arith.constant 0 : i32
    %86 = tpu.memref_slice %arg2[%c0_i32_45, %c0_i32_48] : memref<64x128xf32, #tpu.memory_space<any>> -> memref<1x128xf32, #tpu.memory_space<any>>
    %87 = tpu.memref_squeeze %86 : memref<1x128xf32, #tpu.memory_space<any>> -> memref<128xf32, #tpu.memory_space<any>>
    %c0_i32_49 = arith.constant 0 : i32
    %88 = tpu.memref_slice %arg4[%c0_i32_46, %c0_i32_49] : memref<16x128xf32, #tpu.memory_space<vmem>> -> memref<1x128xf32, #tpu.memory_space<vmem>>
    %89 = tpu.memref_squeeze %88 : memref<1x128xf32, #tpu.memory_space<vmem>> -> memref<128xf32, #tpu.memory_space<vmem>>
    %90 = tpu.memref_slice %arg5[%c2_i32_47] : memref<8x!tpu.dma_semaphore, #tpu.memory_space<semaphore_mem>> -> memref<1x!tpu.dma_semaphore, #tpu.memory_space<semaphore_mem>>
    %91 = tpu.memref_squeeze %90 : memref<1x!tpu.dma_semaphore, #tpu.memory_space<semaphore_mem>> -> memref<!tpu.dma_semaphore, #tpu.memory_space<semaphore_mem>>
    tpu.wait_dma2 semaphore(%91 : memref<!tpu.dma_semaphore, #tpu.memory_space<semaphore_mem>>) src(%87 : memref<128xf32, #tpu.memory_space<any>>) dst(%89 : memref<128xf32, #tpu.memory_space<vmem>>)
    %c0_i32_50 = arith.constant 0 : i32
    %c0_i32_51 = arith.constant 0 : i32
    %c3_i32_52 = arith.constant 3 : i32
    %c0_i32_53 = arith.constant 0 : i32
    %92 = tpu.memref_slice %arg2[%c0_i32_50, %c0_i32_53] : memref<64x128xf32, #tpu.memory_space<any>> -> memref<1x128xf32, #tpu.memory_space<any>>
    %93 = tpu.memref_squeeze %92 : memref<1x128xf32, #tpu.memory_space<any>> -> memref<128xf32, #tpu.memory_space<any>>
    %c0_i32_54 = arith.constant 0 : i32
    %94 = tpu.memref_slice %arg4[%c0_i32_51, %c0_i32_54] : memref<16x128xf32, #tpu.memory_space<vmem>> -> memref<1x128xf32, #tpu.memory_space<vmem>>
    %95 = tpu.memref_squeeze %94 : memref<1x128xf32, #tpu.memory_space<vmem>> -> memref<128xf32, #tpu.memory_space<vmem>>
    %96 = tpu.memref_slice %arg5[%c3_i32_52] : memref<8x!tpu.dma_semaphore, #tpu.memory_space<semaphore_mem>> -> memref<1x!tpu.dma_semaphore, #tpu.memory_space<semaphore_mem>>
    %97 = tpu.memref_squeeze %96 : memref<1x!tpu.dma_semaphore, #tpu.memory_space<semaphore_mem>> -> memref<!tpu.dma_semaphore, #tpu.memory_space<semaphore_mem>>
    tpu.wait_dma2 semaphore(%97 : memref<!tpu.dma_semaphore, #tpu.memory_space<semaphore_mem>>) src(%93 : memref<128xf32, #tpu.memory_space<any>>) dst(%95 : memref<128xf32, #tpu.memory_space<vmem>>)
    %c0_i32_55 = arith.constant 0 : i32
    %c0_i32_56 = arith.constant 0 : i32
    %c4_i32_57 = arith.constant 4 : i32
    %c0_i32_58 = arith.constant 0 : i32
    %98 = tpu.memref_slice %arg2[%c0_i32_55, %c0_i32_58] : memref<64x128xf32, #tpu.memory_space<any>> -> memref<1x128xf32, #tpu.memory_space<any>>
    %99 = tpu.memref_squeeze %98 : memref<1x128xf32, #tpu.memory_space<any>> -> memref<128xf32, #tpu.memory_space<any>>
    %c0_i32_59 = arith.constant 0 : i32
    %100 = tpu.memref_slice %arg4[%c0_i32_56, %c0_i32_59] : memref<16x128xf32, #tpu.memory_space<vmem>> -> memref<1x128xf32, #tpu.memory_space<vmem>>
    %101 = tpu.memref_squeeze %100 : memref<1x128xf32, #tpu.memory_space<vmem>> -> memref<128xf32, #tpu.memory_space<vmem>>
    %102 = tpu.memref_slice %arg5[%c4_i32_57] : memref<8x!tpu.dma_semaphore, #tpu.memory_space<semaphore_mem>> -> memref<1x!tpu.dma_semaphore, #tpu.memory_space<semaphore_mem>>
    %103 = tpu.memref_squeeze %102 : memref<1x!tpu.dma_semaphore, #tpu.memory_space<semaphore_mem>> -> memref<!tpu.dma_semaphore, #tpu.memory_space<semaphore_mem>>
    tpu.wait_dma2 semaphore(%103 : memref<!tpu.dma_semaphore, #tpu.memory_space<semaphore_mem>>) src(%99 : memref<128xf32, #tpu.memory_space<any>>) dst(%101 : memref<128xf32, #tpu.memory_space<vmem>>)
    %c0_i32_60 = arith.constant 0 : i32
    %c0_i32_61 = arith.constant 0 : i32
    %c5_i32_62 = arith.constant 5 : i32
    %c0_i32_63 = arith.constant 0 : i32
    %104 = tpu.memref_slice %arg2[%c0_i32_60, %c0_i32_63] : memref<64x128xf32, #tpu.memory_space<any>> -> memref<1x128xf32, #tpu.memory_space<any>>
    %105 = tpu.memref_squeeze %104 : memref<1x128xf32, #tpu.memory_space<any>> -> memref<128xf32, #tpu.memory_space<any>>
    %c0_i32_64 = arith.constant 0 : i32
    %106 = tpu.memref_slice %arg4[%c0_i32_61, %c0_i32_64] : memref<16x128xf32, #tpu.memory_space<vmem>> -> memref<1x128xf32, #tpu.memory_space<vmem>>
    %107 = tpu.memref_squeeze %106 : memref<1x128xf32, #tpu.memory_space<vmem>> -> memref<128xf32, #tpu.memory_space<vmem>>
    %108 = tpu.memref_slice %arg5[%c5_i32_62] : memref<8x!tpu.dma_semaphore, #tpu.memory_space<semaphore_mem>> -> memref<1x!tpu.dma_semaphore, #tpu.memory_space<semaphore_mem>>
    %109 = tpu.memref_squeeze %108 : memref<1x!tpu.dma_semaphore, #tpu.memory_space<semaphore_mem>> -> memref<!tpu.dma_semaphore, #tpu.memory_space<semaphore_mem>>
    tpu.wait_dma2 semaphore(%109 : memref<!tpu.dma_semaphore, #tpu.memory_space<semaphore_mem>>) src(%105 : memref<128xf32, #tpu.memory_space<any>>) dst(%107 : memref<128xf32, #tpu.memory_space<vmem>>)
    %c0_i32_65 = arith.constant 0 : i32
    %c0_i32_66 = arith.constant 0 : i32
    %c6_i32_67 = arith.constant 6 : i32
    %c0_i32_68 = arith.constant 0 : i32
    %110 = tpu.memref_slice %arg2[%c0_i32_65, %c0_i32_68] : memref<64x128xf32, #tpu.memory_space<any>> -> memref<1x128xf32, #tpu.memory_space<any>>
    %111 = tpu.memref_squeeze %110 : memref<1x128xf32, #tpu.memory_space<any>> -> memref<128xf32, #tpu.memory_space<any>>
    %c0_i32_69 = arith.constant 0 : i32
    %112 = tpu.memref_slice %arg4[%c0_i32_66, %c0_i32_69] : memref<16x128xf32, #tpu.memory_space<vmem>> -> memref<1x128xf32, #tpu.memory_space<vmem>>
    %113 = tpu.memref_squeeze %112 : memref<1x128xf32, #tpu.memory_space<vmem>> -> memref<128xf32, #tpu.memory_space<vmem>>
    %114 = tpu.memref_slice %arg5[%c6_i32_67] : memref<8x!tpu.dma_semaphore, #tpu.memory_space<semaphore_mem>> -> memref<1x!tpu.dma_semaphore, #tpu.memory_space<semaphore_mem>>
    %115 = tpu.memref_squeeze %114 : memref<1x!tpu.dma_semaphore, #tpu.memory_space<semaphore_mem>> -> memref<!tpu.dma_semaphore, #tpu.memory_space<semaphore_mem>>
    tpu.wait_dma2 semaphore(%115 : memref<!tpu.dma_semaphore, #tpu.memory_space<semaphore_mem>>) src(%111 : memref<128xf32, #tpu.memory_space<any>>) dst(%113 : memref<128xf32, #tpu.memory_space<vmem>>)
    %c0_i32_70 = arith.constant 0 : i32
    %c0_i32_71 = arith.constant 0 : i32
    %c7_i32_72 = arith.constant 7 : i32
    %c0_i32_73 = arith.constant 0 : i32
    %116 = tpu.memref_slice %arg2[%c0_i32_70, %c0_i32_73] : memref<64x128xf32, #tpu.memory_space<any>> -> memref<1x128xf32, #tpu.memory_space<any>>
    %117 = tpu.memref_squeeze %116 : memref<1x128xf32, #tpu.memory_space<any>> -> memref<128xf32, #tpu.memory_space<any>>
    %c0_i32_74 = arith.constant 0 : i32
    %118 = tpu.memref_slice %arg4[%c0_i32_71, %c0_i32_74] : memref<16x128xf32, #tpu.memory_space<vmem>> -> memref<1x128xf32, #tpu.memory_space<vmem>>
    %119 = tpu.memref_squeeze %118 : memref<1x128xf32, #tpu.memory_space<vmem>> -> memref<128xf32, #tpu.memory_space<vmem>>
    %120 = tpu.memref_slice %arg5[%c7_i32_72] : memref<8x!tpu.dma_semaphore, #tpu.memory_space<semaphore_mem>> -> memref<1x!tpu.dma_semaphore, #tpu.memory_space<semaphore_mem>>
    %121 = tpu.memref_squeeze %120 : memref<1x!tpu.dma_semaphore, #tpu.memory_space<semaphore_mem>> -> memref<!tpu.dma_semaphore, #tpu.memory_space<semaphore_mem>>
    tpu.wait_dma2 semaphore(%121 : memref<!tpu.dma_semaphore, #tpu.memory_space<semaphore_mem>>) src(%117 : memref<128xf32, #tpu.memory_space<any>>) dst(%119 : memref<128xf32, #tpu.memory_space<vmem>>)
    %c0 = arith.constant 0 : index
    %c0_75 = arith.constant 0 : index
    %122 = vector.load %arg4[%c0, %c0_75] : memref<16x128xf32, #tpu.memory_space<vmem>>, vector<16x128xf32>
    %c0_76 = arith.constant 0 : index
    %c0_77 = arith.constant 0 : index
    %123 = vector.load %arg3[%c0_76, %c0_77] : memref<16x128xf32, #tpu.memory_space<vmem>>, vector<16x128xf32>
    tpu.vector_store %arg3[%c0_76, %c0_77], %122 {strides = array<i32>} : memref<16x128xf32, #tpu.memory_space<vmem>>, vector<16x128xf32>,
    return
  }
  func.func @transform_1(%arg0: i32, %arg1: memref<16xi32, #tpu.memory_space<smem>>) -> (i32, i32) {
    %c0_i32 = arith.constant 0 : i32
    %c0_i32_0 = arith.constant 0 : i32
    return %arg0, %c0_i32 : i32, i32
  }
}

</mosaic_0001>

<llo_original>
// kernel: tpu_custom_call.1
$region0: #{tpu_custom_call.1}
  #allocation0 [shape = 'u32[]', space=smem, size = 0x4, offset = 0x4, fixed_abs, tag = 'smem constant byte address 0x4 - core index']
  #allocation1 [shape = 'u32[144,128]{1,0:T(1,128)}', space=vmem, size = 0x12000, scoped, tag = 'internal scratch']
  #allocation2 [shape = 'f32[16,128]{1,0:T(8,128)}', space=vmem, size = 0x2000, scoped, tag = 'scratch operand']
  #allocation3 [shape = 's32[8]{0}', space=sflag, size = 0x20, scoped, tag = 'scratch operand']
  #allocation4 [shape = 's32[1]{0}', space=sflag, size = 0x4, scoped, tag = 'scoped memory for tpu_custom_call.1']
  #allocation5 [shape = 'u8[512]{0}', space=smem, size = 0x200, scoped, tag = 'prefetched SMEM operand 0']
  #allocation8 [shape = 's32[]', space=sflag, size = 0x4, offset = 0, fixed_abs, tag = 'sflag constant byte address 0x0 - dummy sync flag']
  #allocation9 [shape = 's32[]', space=sflag, size = 0x4, offset = 0, fixed_abs, tag = 'sflag constant byte address 0x0 - dummy sync flag']
  #allocation10 [shape = 'u32[]', space=smem, size = 0x4, offset = 0x44, fixed_abs, tag = 'smem constant byte address 0x44 - assertion arg 0']
  #allocation11 [shape = 'u32[]', space=smem, size = 0x4, offset = 0x48, fixed_abs, tag = 'smem constant byte address 0x48 - assertion arg 1']
  #allocation12 [shape = 's32[]', space=sflag, size = 0x4, offset = 0, fixed_abs, tag = 'sflag constant byte address 0x0 - dummy sync flag']
  #allocation13 [shape = 's32[]', space=sflag, size = 0x4, offset = 0, fixed_abs, tag = 'sflag constant byte address 0x0 - dummy sync flag']
  #allocation14 [shape = 's32[]', space=sflag, size = 0x4, offset = 0, fixed_abs, tag = 'sflag constant byte address 0x0 - dummy sync flag']
  #allocation15 [shape = 's32[]', space=sflag, size = 0x4, offset = 0, fixed_abs, tag = 'sflag constant byte address 0x0 - dummy sync flag']
  #allocation16 [shape = 's32[]', space=sflag, size = 0x4, offset = 0, fixed_abs, tag = 'sflag constant byte address 0x0 - dummy sync flag']
  #allocation17 [shape = 's32[]', space=sflag, size = 0x4, offset = 0, fixed_abs, tag = 'sflag constant byte address 0x0 - dummy sync flag']
  #allocation18 [shape = 's32[]', space=sflag, size = 0x4, offset = 0, fixed_abs, tag = 'sflag constant byte address 0x0 - dummy sync flag']
  #allocation19 [shape = 's32[]', space=sflag, size = 0x4, offset = 0, fixed_abs, tag = 'sflag constant byte address 0x0 - dummy sync flag']
  #allocation20 [shape = 's32[]', space=sflag, size = 0x4, offset = 0, fixed_abs, tag = 'sflag constant byte address 0x0 - dummy sync flag']
  #allocation21 [shape = 's32[]', space=sflag, size = 0x4, offset = 0, fixed_abs, tag = 'sflag constant byte address 0x0 - dummy sync flag']
  #allocation22 [shape = 's32[]', space=sflag, size = 0x4, offset = 0, fixed_abs, tag = 'sflag constant byte address 0x0 - dummy sync flag']
  #allocation23 [shape = 's32[]', space=sflag, size = 0x4, offset = 0, fixed_abs, tag = 'sflag constant byte address 0x0 - dummy sync flag']
  #allocation24 [shape = 's32[]', space=sflag, size = 0x4, offset = 0, fixed_abs, tag = 'sflag constant byte address 0x0 - dummy sync flag']
  #allocation25 [shape = 's32[]', space=sflag, size = 0x4, offset = 0, fixed_abs, tag = 'sflag constant byte address 0x0 - dummy sync flag']
  #allocation26 [shape = 's32[]', space=sflag, size = 0x4, offset = 0, fixed_abs, tag = 'sflag constant byte address 0x0 - dummy sync flag']
  #allocation27 [shape = 's32[]', space=sflag, size = 0x4, offset = 0, fixed_abs, tag = 'sflag constant byte address 0x0 - dummy sync flag']
  %s0 = inlined_call_operand.hbm [shape: s32[16], index: 0, kind: input, shape index: {}]
  %s1 = inlined_call_operand.hbm [shape: f32[64,128], index: 1, kind: input, shape index: {}]
  %s2 = inlined_call_operand.hbm [shape: f32[16,128], index: 2, kind: output, shape index: {}]
  %s3 = sld [smem:[#allocation0]]
  $region53: #{tpu_custom_call.1} parent=0
    _
  %s5 = ssub.s32 1, %s3
  %s6 = scalar_select 0, %s5, %s3
  %8 = dma.hbm_to_smem %s0, 16, [#allocation5], [#allocation4]
  %9 = dma.done [#allocation4], 16
  %10 = sfence
  $region1: #{tpu_custom_call.1} parent=0
    #allocation6 [shape = 'u8[8192]{0}', space=vmem, size = 0x2000, scoped, tag = 'output window, operand 0, single buffered']
    #allocation7 [shape = 's32[1]{0}', space=sflag, size = 0x4, scoped, tag = 'scoped memory for tpu_custom_call.1']
    %11 = vsyncpa [#allocation7], 0
    %s12 = smul.u32 0, 16
    %s13 = sld [smem:[#allocation5 + %s12]]
    %s14 = smul.addr %s13, 16
    %s15 = scalar_lea.hbm %s1, %s14
    // Predicated region
    $region2: #{tpu_custom_call.1} parent=1 // pred_check
      _
    $region3: #{tpu_custom_call.1} parent=1 // pred_check_branch
      %17 = sbr.rel target = $region5
    $region4: #{tpu_custom_call.1} parent=1 // pred_region
      %18 = sst [smem:[#allocation10]] [#allocation9]
      %19 = sst [smem:[#allocation11]] [#allocation8]
    $region5: #{tpu_custom_call.1} parent=1 // pred_fallthru
      _
    %21 = shalt.err (0)
    %s23 = sshll.u32 [#allocation2], 4
    %s24 = int_to_ptr.vmem [resolvable:$true] %s23
    %26 = dma.hbm_to_vmem [thread:$0]  %s15, 16, %s24, [#allocation3]
    %s27 = sadd.s32 %s12, 1
    %s28 = sld [smem:[#allocation5 + %s27]]
    %s29 = smul.addr %s28, 16
    %s30 = scalar_lea.hbm %s1, %s29
    %s31 = scalar_lea.vmem [#allocation2], 1
    %s32 = scalar_lea.sflag [#allocation3], 1
    // Predicated region
    $region6: #{tpu_custom_call.1} parent=1 // pred_check
      _
    $region7: #{tpu_custom_call.1} parent=1 // pred_check_branch
      %34 = sbr.rel target = $region9
    $region8: #{tpu_custom_call.1} parent=1 // pred_region
      %35 = sst [smem:[#allocation10]] [#allocation13]
      %36 = sst [smem:[#allocation11]] [#allocation12]
    $region9: #{tpu_custom_call.1} parent=1 // pred_fallthru
      _
    %38 = shalt.err (0)
    %s40 = sshll.u32 %s31, 4
    %s41 = int_to_ptr.vmem [resolvable:$true] %s40
    %43 = dma.hbm_to_vmem [thread:$0]  %s30, 16, %s41, %s32
    %s44 = sadd.s32 %s12, 2
    %s45 = sld [smem:[#allocation5 + %s44]]
    %s46 = smul.addr %s45, 16
    %s47 = scalar_lea.hbm %s1, %s46
    %s48 = scalar_lea.vmem [#allocation2], 2
    %s49 = scalar_lea.sflag [#allocation3], 2
    // Predicated region
    $region10: #{tpu_custom_call.1} parent=1 // pred_check
      _
    $region11: #{tpu_custom_call.1} parent=1 // pred_check_branch
      %51 = sbr.rel target = $region13
    $region12: #{tpu_custom_call.1} parent=1 // pred_region
      %52 = sst [smem:[#allocation10]] [#allocation15]
      %53 = sst [smem:[#allocation11]] [#allocation14]
    $region13: #{tpu_custom_call.1} parent=1 // pred_fallthru
      _
    %55 = shalt.err (0)
    %s57 = sshll.u32 %s48, 4
    %s58 = int_to_ptr.vmem [resolvable:$true] %s57
    %60 = dma.hbm_to_vmem [thread:$0]  %s47, 16, %s58, %s49
    %s61 = sadd.s32 %s12, 3
    %s62 = sld [smem:[#allocation5 + %s61]]
    %s63 = smul.addr %s62, 16
    %s64 = scalar_lea.hbm %s1, %s63
    %s65 = scalar_lea.vmem [#allocation2], 3
    %s66 = scalar_lea.sflag [#allocation3], 3
    // Predicated region
    $region14: #{tpu_custom_call.1} parent=1 // pred_check
      _
    $region15: #{tpu_custom_call.1} parent=1 // pred_check_branch
      %68 = sbr.rel target = $region17
    $region16: #{tpu_custom_call.1} parent=1 // pred_region
      %69 = sst [smem:[#allocation10]] [#allocation17]
      %70 = sst [smem:[#allocation11]] [#allocation16]
    $region17: #{tpu_custom_call.1} parent=1 // pred_fallthru
      _
    %72 = shalt.err (0)
    %s74 = sshll.u32 %s65, 4
    %s75 = int_to_ptr.vmem [resolvable:$true] %s74
    %77 = dma.hbm_to_vmem [thread:$0]  %s64, 16, %s75, %s66
    %s78 = sadd.s32 %s12, 4
    %s79 = sld [smem:[#allocation5 + %s78]]
    %s80 = smul.addr %s79, 16
    %s81 = scalar_lea.hbm %s1, %s80
    %s82 = scalar_lea.vmem [#allocation2], 4
    %s83 = scalar_lea.sflag [#allocation3], 4
    // Predicated region
    $region18: #{tpu_custom_call.1} parent=1 // pred_check
      _
    $region19: #{tpu_custom_call.1} parent=1 // pred_check_branch
      %85 = sbr.rel target = $region21
    $region20: #{tpu_custom_call.1} parent=1 // pred_region
      %86 = sst [smem:[#allocation10]] [#allocation19]
      %87 = sst [smem:[#allocation11]] [#allocation18]
    $region21: #{tpu_custom_call.1} parent=1 // pred_fallthru
      _
    %89 = shalt.err (0)
    %s91 = sshll.u32 %s82, 4
    %s92 = int_to_ptr.vmem [resolvable:$true] %s91
    %94 = dma.hbm_to_vmem [thread:$0]  %s81, 16, %s92, %s83
    %s95 = sadd.s32 %s12, 5
    %s96 = sld [smem:[#allocation5 + %s95]]
    %s97 = smul.addr %s96, 16
    %s98 = scalar_lea.hbm %s1, %s97
    %s99 = scalar_lea.vmem [#allocation2], 5
    %s100 = scalar_lea.sflag [#allocation3], 5
    // Predicated region
    $region22: #{tpu_custom_call.1} parent=1 // pred_check
      _
    $region23: #{tpu_custom_call.1} parent=1 // pred_check_branch
      %102 = sbr.rel target = $region25
    $region24: #{tpu_custom_call.1} parent=1 // pred_region
      %103 = sst [smem:[#allocation10]] [#allocation21]
      %104 = sst [smem:[#allocation11]] [#allocation20]
    $region25: #{tpu_custom_call.1} parent=1 // pred_fallthru
      _
    %106 = shalt.err (0)
    %s108 = sshll.u32 %s99, 4
    %s109 = int_to_ptr.vmem [resolvable:$true] %s108
    %111 = dma.hbm_to_vmem [thread:$0]  %s98, 16, %s109, %s100
    %s112 = sadd.s32 %s12, 6
    %s113 = sld [smem:[#allocation5 + %s112]]
    %s114 = smul.addr %s113, 16
    %s115 = scalar_lea.hbm %s1, %s114
    %s116 = scalar_lea.vmem [#allocation2], 6
    %s117 = scalar_lea.sflag [#allocation3], 6
    // Predicated region
    $region26: #{tpu_custom_call.1} parent=1 // pred_check
      _
    $region27: #{tpu_custom_call.1} parent=1 // pred_check_branch
      %119 = sbr.rel target = $region29
    $region28: #{tpu_custom_call.1} parent=1 // pred_region
      %120 = sst [smem:[#allocation10]] [#allocation23]
      %121 = sst [smem:[#allocation11]] [#allocation22]
    $region29: #{tpu_custom_call.1} parent=1 // pred_fallthru
      _
    %123 = shalt.err (0)
    %s125 = sshll.u32 %s116, 4
    %s126 = int_to_ptr.vmem [resolvable:$true] %s125
    %128 = dma.hbm_to_vmem [thread:$0]  %s115, 16, %s126, %s117
    %s129 = sadd.s32 %s12, 7
    %s130 = sld [smem:[#allocation5 + %s129]]
    %s131 = smul.addr %s130, 16
    %s132 = scalar_lea.hbm %s1, %s131
    %s133 = scalar_lea.vmem [#allocation2], 7
    %s134 = scalar_lea.sflag [#allocation3], 7
    // Predicated region
    $region30: #{tpu_custom_call.1} parent=1 // pred_check
      _
    $region31: #{tpu_custom_call.1} parent=1 // pred_check_branch
      %136 = sbr.rel target = $region33
    $region32: #{tpu_custom_call.1} parent=1 // pred_region
      %137 = sst [smem:[#allocation10]] [#allocation25]
      %138 = sst [smem:[#allocation11]] [#allocation24]
    $region33: #{tpu_custom_call.1} parent=1 // pred_fallthru
      _
    %140 = shalt.err (0)
    %s142 = sshll.u32 %s133, 4
    %s143 = int_to_ptr.vmem [resolvable:$true] %s142
    %145 = dma.hbm_to_vmem [thread:$0]  %s132, 16, %s143, %s134
    loop: start=0, step=1, limit=8
    $region34: #{tpu_custom_call.1} parent=1 // loop_pre_header
      _
    $region35: #{tpu_custom_call.1} parent=1 // loop_header
      %s147 = sphi 0, %s151
      %p148 = scmp.ge.s32.totalorder %s147, 8
    $region36: #{tpu_custom_call.1} parent=1 // loop_header_branch
      %150 = sbr.rel (%p148) target = $region40
    $region37: #{tpu_custom_call.1} parent=1 // loop_body
      %p152 = scmp.lt.s32.totalorder %s147, 0
      %s153 = ssub.s32 0, %s147
      %s154 = scalar_select %p152, %s153, %s147
      %s155 = sand.u32 %s154, 7
      %s156 = ssub.s32 0, %s155
      %s157 = scalar_select %p152, %s156, %s155
      %p158 = scmp.ne.s32.totalorder %s157, 0
      %p159 = scmp.lt.s32.totalorder %s157, 0
      %p160 = pnand %p159, %p158
      %p161 = pneg %p160
      %s162 = sadd.s32 %s157, 8
      %s163 = scalar_select %p161, %s162, %s157
      %s164 = scalar_lea.sflag [#allocation3], %s163
      %166 = dma.done %s164, 16
      %s167 = sadd.s32 %s147, 8
      %s168 = sadd.s32 %s12, %s167
      %s169 = sld [smem:[#allocation5 + %s168]]
      %p170 = scmp.lt.s32.totalorder %s167, 0
      %s171 = ssub.s32 0, %s167
      %s172 = scalar_select %p170, %s171, %s167
      %s173 = sand.u32 %s172, 7
      %s174 = ssub.s32 0, %s173
      %s175 = scalar_select %p170, %s174, %s173
      %p176 = scmp.ne.s32.totalorder %s175, 0
      %p177 = scmp.lt.s32.totalorder %s175, 0
      %p178 = pnand %p177, %p176
      %p179 = pneg %p178
      %s180 = sadd.s32 %s175, 8
      %s181 = scalar_select %p179, %s180, %s175
      %s182 = smul.addr %s169, 16
      %s183 = scalar_lea.hbm %s1, %s182
      %s184 = scalar_lea.vmem [#allocation2], %s167
      %s185 = scalar_lea.sflag [#allocation3], %s181
      // Predicated region
      $region41: #{tpu_custom_call.1} parent=37 // pred_check
        _
      $region42: #{tpu_custom_call.1} parent=37 // pred_check_branch
        %187 = sbr.rel target = $region44
      $region43: #{tpu_custom_call.1} parent=37 // pred_region
        %188 = sst [smem:[#allocation10]] [#allocation27]
        %189 = sst [smem:[#allocation11]] [#allocation26]
      $region44: #{tpu_custom_call.1} parent=37 // pred_fallthru
        _
      %191 = shalt.err (0)
      %s193 = sshll.u32 %s184, 4
      %s194 = int_to_ptr.vmem [resolvable:$true] %s193
      %196 = dma.hbm_to_vmem [thread:$0]  %s183, 16, %s194, %s185
    $region38: #{tpu_custom_call.1} parent=1 // loop_footer
      %s151 = sadd.s32 1, %s147
    $region39: #{tpu_custom_call.1} parent=1 // loop_footer_branch
      %146 = sbr.rel target = $region35
    $region40: #{tpu_custom_call.1} parent=1 // loop_exit
      _
    %198 = dma.done [#allocation3], 16
    %200 = dma.done %s32, 16
    %202 = dma.done %s49, 16
    %204 = dma.done %s66, 16
    %206 = dma.done %s83, 16
    %208 = dma.done %s100, 16
    %210 = dma.done %s117, 16
    %212 = dma.done %s134, 16
    %v213 = vld [vmem:[#allocation2] sm:$0xff]
    %v214 = vld [vmem:[#allocation2 + $0x8] sm:$0xff]
    %215 = vst [vmem:[#allocation6] sm:$0xff] %v213
    %216 = vst [vmem:[#allocation6 + $0x8] sm:$0xff] %v214
    // Predicated region
    $region45: #{tpu_custom_call.1} parent=1 // pred_check
      _
    $region46: #{tpu_custom_call.1} parent=1 // pred_check_branch
      %218 = sbr.rel (0) target = $region48
    $region47: #{tpu_custom_call.1} parent=1 // pred_region
      %s220 = ssub.s32 256, 256
      %221 = vsyncadd [#allocation7], %s220
      %s222 = sshll.u32 [#allocation6], 4
      %s223 = int_to_ptr.vmem [resolvable:$true] %s222
      %228 = dma.vmem_to_hbm [thread:$0]  %s223, 256, %s2, [#allocation7], 128, 128, 8
    $region48: #{tpu_custom_call.1} parent=1 // pred_fallthru
      _
    // Predicated region
    $region49: #{tpu_custom_call.1} parent=1 // pred_check
      _
    $region50: #{tpu_custom_call.1} parent=1 // pred_check_branch
      %230 = sbr.rel (0) target = $region52
    $region51: #{tpu_custom_call.1} parent=1 // pred_region
      %231 = dma.done [#allocation7], 256
    $region52: #{tpu_custom_call.1} parent=1 // pred_fallthru
      _
    %232 = vsyncpa [#allocation7], 1
  %233 = vsyncmov [#allocation3]
  %s234 = vpop.sfrf %233
  %p235 = scmp.eq.s32.totalorder %s234, 0
  %p236 = pneg %p235
  %238 = shalt.err (%p236)
  %s239 = scalar_lea.sflag [#allocation3], 1
  %240 = vsyncmov %s239
  %s241 = vpop.sfrf %240
  %p242 = scmp.eq.s32.totalorder %s241, 0
  %p243 = pneg %p242
  %245 = shalt.err (%p243)
  %s246 = scalar_lea.sflag [#allocation3], 2
  %247 = vsyncmov %s246
  %s248 = vpop.sfrf %247
  %p249 = scmp.eq.s32.totalorder %s248, 0
  %p250 = pneg %p249
  %252 = shalt.err (%p250)
  %s253 = scalar_lea.sflag [#allocation3], 3
  %254 = vsyncmov %s253
  %s255 = vpop.sfrf %254
  %p256 = scmp.eq.s32.totalorder %s255, 0
  %p257 = pneg %p256
  %259 = shalt.err (%p257)
  %s260 = scalar_lea.sflag [#allocation3], 4
  %261 = vsyncmov %s260
  %s262 = vpop.sfrf %261
  %p263 = scmp.eq.s32.totalorder %s262, 0
  %p264 = pneg %p263
  %266 = shalt.err (%p264)
  %s267 = scalar_lea.sflag [#allocation3], 5
  %268 = vsyncmov %s267
  %s269 = vpop.sfrf %268
  %p270 = scmp.eq.s32.totalorder %s269, 0
  %p271 = pneg %p270
  %273 = shalt.err (%p271)
  %s274 = scalar_lea.sflag [#allocation3], 6
  %275 = vsyncmov %s274
  %s276 = vpop.sfrf %275
  %p277 = scmp.eq.s32.totalorder %s276, 0
  %p278 = pneg %p277
  %280 = shalt.err (%p278)
  %s281 = scalar_lea.sflag [#allocation3], 7
  %282 = vsyncmov %s281
  %s283 = vpop.sfrf %282
  %p284 = scmp.eq.s32.totalorder %s283, 0
  %p285 = pneg %p284
  %287 = shalt.err (%p285)

</llo_original>
